<compile_context>
chip_gen: v7x
topology: tpu7x:2x2x1
jax: 0.10.0
libtpu: 0.0.40
codegen_flags: <defaults>
</compile_context>

<pallas_src>
import functools

import jax
import jax.numpy as jnp
from jax.experimental import pallas as pl
from jax.experimental.pallas import tpu as pltpu


_LANE = 128
_CHUNK = 32                              # sublane rows processed per inner-loop step
_TARGET_BLOCK_BYTES = 6 * 1024 * 1024    # ~6 MiB per (C, TR, 128) f32 block
_VMEM_LIMIT_BYTES = 48 << 20             # in+out double-buffered blocks fit with headroom
_MIN_GRID_STEPS = 4                      # keep both v7x TensorCores busy


def _subnet_shapes(s1, s2):
    # name -> (c_in, c_out), matching the PyTorch module definition order.
    return [("E", 1, s1), ("F", s2, s1), ("G", s1, s2), ("H", s1, s2),
            ("I", 1, s2), ("J", 1, s2), ("K", s1, 1), ("L", s2, 1)]


def _pack_params(params, s1, s2):
    """Pack all 8 subnet weights+biases into one flat f32 vector for SMEM.

    Layout per subnet: [W row-major (cin, cout), b (cout)].
    Returns (packed jnp array, {name: (offset, cin, cout)}, total length).
    """
    offsets = {}
    chunks = []
    off = 0
    for name, cin, cout in _subnet_shapes(s1, s2):
        offsets[name] = (off, cin, cout)
        chunks.append(params["w" + name].reshape(-1).astype(jnp.float32))
        chunks.append(params["b" + name].reshape(-1).astype(jnp.float32))
        off += cin * cout + cout
    return jnp.concatenate(chunks), offsets, off


def _pick_layout(n, hw, c, itemsize=4,
                 target_block_bytes=_TARGET_BLOCK_BYTES,
                 min_steps=_MIN_GRID_STEPS):
    """Choose (rows r, row-tile tr, padded spatial extent hw_pad).

    The input is viewed as (N, C, r, 128) with r = hw_pad // 128.  tr always
    divides r and is either a multiple of 8 or equal to r (full extent), so
    the (8,128) BlockSpec divisibility rule always holds.  tr is sized to keep
    the per-step block near `target_block_bytes` while leaving the grid with
    at least `min_steps` steps when possible.
    """
    lb = _LANE
    bytes_per_row = itemsize * c * lb
    max_tr = max(8, (target_block_bytes // bytes_per_row) // 8 * 8)

    if hw % lb == 0:
        r = hw // lb
        cands = [d for d in range(8, min(r, max_tr) + 1, 8) if r % d == 0]
        if not cands and r * bytes_per_row <= target_block_bytes:
            cands = [r]                   # small r: full-extent row block is legal
        if cands:
            tr = max(cands)
            while n * (r // tr) < min_steps:
                smaller = [d for d in cands if d < tr]
                if not smaller:
                    break
                tr = max(smaller)
            return r, tr, hw              # no padding needed

    # Pad HW so rows split evenly into lane-dense, 8-row-aligned tiles.
    r0 = -(-hw // lb)                                     # ceil(hw / 128)
    want_row_blocks = max(1, -(-min_steps // max(1, n)))  # row blocks per batch elem
    tr_cap = max(8, ((-(-r0 // want_row_blocks) + 7) // 8) * 8)
    tr = min(max_tr, tr_cap)
    r = -(-r0 // tr) * tr
    return r, tr, r * lb


def _make_kernel(s1, s2, c, clamp, offsets, n_params, chunk):
    def kernel(p_ref, x_ref, o_ref):
        tr = x_ref.shape[1]

        # Hoist ALL scalar weight/bias SMEM loads out of the chunk loop; they
        # are closed over by the loop body (loop-invariant scalar operands).
        pv = [p_ref[k] for k in range(n_params)]

        def lin(rows, name):
            """Pointwise-conv subnet as broadcast FMAs with hoisted scalars."""
            off, cin, cout = offsets[name]
            outs = []
            for j in range(cout):
                acc = rows[0] * pv[off + j]
                for i in range(1, cin):
                    acc = acc + rows[i] * pv[off + i * cout + j]
                outs.append(acc + pv[off + cin * cout + j])   # + bias
            return outs

        def process(r0, nrows):
            rows = pl.ds(r0, nrows)

            def load(ch):
                return x_ref[ch, rows, :].astype(jnp.float32)

            x1 = [load(i) for i in range(s1)]
            x2 = [load(s1 + i) for i in range(s2)]
            x3 = [load(c - 1)]

            # y1 = x1 + E(x3) + F(x2)
            e = lin(x3, "E")
            f = lin(x2, "F")
            y1 = [x1[j] + e[j] + f[j] for j in range(s1)]

            # s = clamp * (sigmoid(H(y1)) * 2 - 1) == clamp * tanh(H(y1) / 2)
            h = lin(y1, "H")
            s = [clamp * jnp.tanh(0.5 * h[j]) for j in range(s2)]

            # y3 = x3 + K(y1) + L(x2)
            kk = lin(y1, "K")
            ll = lin(x2, "L")
            y3 = [x3[0] + kk[0] + ll[0]]

            # t = clamp * (sigmoid(J(y3)) * 2 - 1) == clamp * tanh(J(y3) / 2)
            jv = lin(y3, "J")
            t = [clamp * jnp.tanh(0.5 * jv[j]) for j in range(s2)]

            # y2 = x2 * exp(s + t) + G(y1) + I(y3)
            g = lin(y1, "G")
            iv = lin(y3, "I")
            y2 = [x2[j] * jnp.exp(s[j] + t[j]) + g[j] + iv[j] for j in range(s2)]

            # direct per-channel sub-stores (lane-dense, no concatenate)
            for j in range(s1):
                o_ref[j, rows, :] = y1[j].astype(o_ref.dtype)
            for j in range(s2):
                o_ref[s1 + j, rows, :] = y2[j].astype(o_ref.dtype)
            o_ref[c - 1, rows, :] = y3[0].astype(o_ref.dtype)

        n_full = tr // chunk
        tail = tr % chunk
        if n_full > 0:
            @pl.loop(0, n_full)
            def _(k):
                process(pl.multiple_of(k * chunk, chunk), chunk)
        if tail > 0:
            process(n_full * chunk, tail)

    return kernel


def three_c_inv_block_fwd(x_nchw, params, *, split_len1, clamp=1.0):
    """Forward (rev=False) of threeCInvBlock with 1x1-conv subnets.

    x_nchw: (N, C, H, W); params: dict of weight/bias arrays (see init_params).
    """
    n, c, h, w = x_nchw.shape
    s1 = split_len1
    s2 = c - s1 - 1
    hw = h * w

    r, tr, hw_pad = _pick_layout(n, hw, c)

    xf = x_nchw.reshape(n, c, hw)
    if hw_pad != hw:
        xf = jnp.pad(xf, ((0, 0), (0, 0), (0, hw_pad - hw)))
    x4 = xf.reshape(n, c, r, _LANE)            # lane-dense view, no transpose

    packed, offsets, n_params = _pack_params(params, s1, s2)
    kernel = _make_kernel(s1, s2, c, clamp, offsets, n_params, _CHUNK)

    blk = pl.BlockSpec((None, c, tr, _LANE), lambda i, j: (i, 0, j, 0))

    out = pl.pallas_call(
        kernel,
        out_shape=jax.ShapeDtypeStruct((n, c, r, _LANE), x_nchw.dtype),
        grid_spec=pltpu.PrefetchScalarGridSpec(
            num_scalar_prefetch=0,
            grid=(n, r // tr),
            in_specs=[
                pl.BlockSpec(memory_space=pltpu.MemorySpace.SMEM),  # packed weights
                blk,                                                # x block
            ],
            out_specs=blk,
        ),
        compiler_params=pltpu.CompilerParams(
            dimension_semantics=("parallel", "parallel"),
            vmem_limit_bytes=_VMEM_LIMIT_BYTES),
    )(packed, x4)

    out = out.reshape(n, c, hw_pad)
    if hw_pad != hw:
        out = out[:, :, :hw]
    return out.reshape(n, c, h, w)


def init_params(key, split_len1, split_len2):
    """Deterministic 1x1-conv subnet parameters.

    Subnet X(c_in, c_out) -> weight wX of shape (c_in, c_out), bias bX (1, c_out).
    """
    params = {}
    for i, (name, cin, cout) in enumerate(_subnet_shapes(split_len1, split_len2)):
        kw, kb = jax.random.split(jax.random.fold_in(key, i))
        params["w" + name] = 0.1 * jax.random.normal(kw, (cin, cout), jnp.float32)
        params["b" + name] = 0.1 * jax.random.normal(kb, (1, cout), jnp.float32)
    return params


def reference_fwd(x_nchw, params, *, split_len1, clamp=1.0):
    """Pure-JAX reference mirroring the PyTorch forward (rev=False)."""
    n, c, h, w = x_nchw.shape
    s1 = split_len1
    s2 = c - s1 - 1
    xf = jnp.transpose(x_nchw, (0, 2, 3, 1)).reshape(-1, c)
    x1, x2, x3 = xf[:, :s1], xf[:, s1:s1 + s2], xf[:, c - 1:c]

    def lin(v, name):
        return v @ params["w" + name] + params["b" + name]

    y1 = x1 + lin(x3, "E") + lin(x2, "F")
    s = clamp * (jax.nn.sigmoid(lin(y1, "H")) * 2 - 1)
    y3 = x3 + lin(y1, "K") + lin(x2, "L")
    t = clamp * (jax.nn.sigmoid(lin(y3, "J")) * 2 - 1)
    y2 = x2 * jnp.exp(s + t) + lin(y1, "G") + lin(y3, "I")
    out = jnp.concatenate([y1, y2, y3], axis=-1)
    return jnp.transpose(out.reshape(n, h, w, c), (0, 3, 1, 2))


if __name__ == "__main__":
    # Small shapes consistent with the module: channel_num=4, channel_split_num=2
    # -> split_len1=2, split_len2=1, plus the trailing single channel.
    CLAMP = 1.0
    key = jax.random.PRNGKey(0)

    # Case 1: HW a multiple of 128 (no padding path).
    N, C, H, W = 2, 4, 16, 16
    SPLIT1 = 2
    kx, kp = jax.random.split(key)
    x = jax.random.normal(kx, (N, C, H, W), jnp.float32)
    params = init_params(kp, SPLIT1, C - SPLIT1 - 1)

    fwd = jax.jit(functools.partial(three_c_inv_block_fwd,
                                    split_len1=SPLIT1, clamp=CLAMP))
    y = fwd(x, params)
    jax.block_until_ready(y)
    y_ref = reference_fwd(x, params, split_len1=SPLIT1, clamp=CLAMP)
    assert y.shape == (N, C, H, W)
    assert jnp.allclose(y, y_ref, atol=1e-5, rtol=1e-5), "mismatch vs reference (128-aligned HW)"

    # Case 2: odd spatial size -> exercises the lane-dense padding path.
    N2, H2, W2 = 1, 15, 15
    kx2, _ = jax.random.split(kx)
    x2 = jax.random.normal(kx2, (N2, C, H2, W2), jnp.float32)
    y2 = jax.jit(functools.partial(three_c_inv_block_fwd,
                                   split_len1=SPLIT1, clamp=CLAMP))(x2, params)
    jax.block_until_ready(y2)
    y2_ref = reference_fwd(x2, params, split_len1=SPLIT1, clamp=CLAMP)
    assert y2.shape == (N2, C, H2, W2)
    assert jnp.allclose(y2, y2_ref, atol=1e-5, rtol=1e-5), "mismatch vs reference (odd HW)"

    print("KERNEL_OK")
</pallas_src>

<mosaic_0001>
module attributes {stable_mosaic.version = 11 : i64} {
  func.func @kernel(%arg0: i32, %arg1: i32, %arg2: memref<23xf32, #tpu.memory_space<smem>>, %arg3: memref<1x4x2x128xf32, #tpu.memory_space<vmem>>, %arg4: memref<1x4x2x128xf32, #tpu.memory_space<vmem>>) attributes {dimension_semantics = [#tpu.dimension_semantics<parallel>, #tpu.dimension_semantics<parallel>], iteration_bounds = array<i64: 2, 1>, scalar_prefetch = 0 : i64, scratch_operands = 0 : i64, tpu.core_type = #tpu.core_type<tc>, window_params = [{transform_indices = @transform_0, window_bounds = array<i64: 23>}, {transform_indices = @transform_1, window_bounds = array<i64: 1, 4, 2, 128>}, {transform_indices = @transform_2, window_bounds = array<i64: 1, 4, 2, 128>}]} {
    %c0 = arith.constant 0 : index
    %0 = memref.load %arg2[%c0] : memref<23xf32, #tpu.memory_space<smem>>
    %c1 = arith.constant 1 : index
    %1 = memref.load %arg2[%c1] : memref<23xf32, #tpu.memory_space<smem>>
    %c2 = arith.constant 2 : index
    %2 = memref.load %arg2[%c2] : memref<23xf32, #tpu.memory_space<smem>>
    %c3 = arith.constant 3 : index
    %3 = memref.load %arg2[%c3] : memref<23xf32, #tpu.memory_space<smem>>
    %c4 = arith.constant 4 : index
    %4 = memref.load %arg2[%c4] : memref<23xf32, #tpu.memory_space<smem>>
    %c5 = arith.constant 5 : index
    %5 = memref.load %arg2[%c5] : memref<23xf32, #tpu.memory_space<smem>>
    %c6 = arith.constant 6 : index
    %6 = memref.load %arg2[%c6] : memref<23xf32, #tpu.memory_space<smem>>
    %c7 = arith.constant 7 : index
    %7 = memref.load %arg2[%c7] : memref<23xf32, #tpu.memory_space<smem>>
    %c8 = arith.constant 8 : index
    %8 = memref.load %arg2[%c8] : memref<23xf32, #tpu.memory_space<smem>>
    %c9 = arith.constant 9 : index
    %9 = memref.load %arg2[%c9] : memref<23xf32, #tpu.memory_space<smem>>
    %c10 = arith.constant 10 : index
    %10 = memref.load %arg2[%c10] : memref<23xf32, #tpu.memory_space<smem>>
    %c11 = arith.constant 11 : index
    %11 = memref.load %arg2[%c11] : memref<23xf32, #tpu.memory_space<smem>>
    %c12 = arith.constant 12 : index
    %12 = memref.load %arg2[%c12] : memref<23xf32, #tpu.memory_space<smem>>
    %c13 = arith.constant 13 : index
    %13 = memref.load %arg2[%c13] : memref<23xf32, #tpu.memory_space<smem>>
    %c14 = arith.constant 14 : index
    %14 = memref.load %arg2[%c14] : memref<23xf32, #tpu.memory_space<smem>>
    %c15 = arith.constant 15 : index
    %15 = memref.load %arg2[%c15] : memref<23xf32, #tpu.memory_space<smem>>
    %c16 = arith.constant 16 : index
    %16 = memref.load %arg2[%c16] : memref<23xf32, #tpu.memory_space<smem>>
    %c17 = arith.constant 17 : index
    %17 = memref.load %arg2[%c17] : memref<23xf32, #tpu.memory_space<smem>>
    %c18 = arith.constant 18 : index
    %18 = memref.load %arg2[%c18] : memref<23xf32, #tpu.memory_space<smem>>
    %c19 = arith.constant 19 : index
    %19 = memref.load %arg2[%c19] : memref<23xf32, #tpu.memory_space<smem>>
    %c20 = arith.constant 20 : index
    %20 = memref.load %arg2[%c20] : memref<23xf32, #tpu.memory_space<smem>>
    %c21 = arith.constant 21 : index
    %21 = memref.load %arg2[%c21] : memref<23xf32, #tpu.memory_space<smem>>
    %c22 = arith.constant 22 : index
    %22 = memref.load %arg2[%c22] : memref<23xf32, #tpu.memory_space<smem>>
    %c0_0 = arith.constant 0 : index
    %c0_1 = arith.constant 0 : index
    %c0_2 = arith.constant 0 : index
    %c0_3 = arith.constant 0 : index
    %23 = vector.load %arg3[%c0_0, %c0_1, %c0_2, %c0_3] : memref<1x4x2x128xf32, #tpu.memory_space<vmem>>, vector<1x1x2x128xf32>
    %24 = vector.shape_cast %23 : vector<1x1x2x128xf32> to vector<2x128xf32>
    %c0_4 = arith.constant 0 : index
    %c1_5 = arith.constant 1 : index
    %c0_6 = arith.constant 0 : index
    %c0_7 = arith.constant 0 : index
    %25 = vector.load %arg3[%c0_4, %c1_5, %c0_6, %c0_7] : memref<1x4x2x128xf32, #tpu.memory_space<vmem>>, vector<1x1x2x128xf32>
    %26 = vector.shape_cast %25 : vector<1x1x2x128xf32> to vector<2x128xf32>
    %c0_8 = arith.constant 0 : index
    %c2_9 = arith.constant 2 : index
    %c0_10 = arith.constant 0 : index
    %c0_11 = arith.constant 0 : index
    %27 = vector.load %arg3[%c0_8, %c2_9, %c0_10, %c0_11] : memref<1x4x2x128xf32, #tpu.memory_space<vmem>>, vector<1x1x2x128xf32>
    %28 = vector.shape_cast %27 : vector<1x1x2x128xf32> to vector<2x128xf32>
    %c0_12 = arith.constant 0 : index
    %c3_13 = arith.constant 3 : index
    %c0_14 = arith.constant 0 : index
    %c0_15 = arith.constant 0 : index
    %29 = vector.load %arg3[%c0_12, %c3_13, %c0_14, %c0_15] : memref<1x4x2x128xf32, #tpu.memory_space<vmem>>, vector<1x1x2x128xf32>
    %30 = vector.shape_cast %29 : vector<1x1x2x128xf32> to vector<2x128xf32>
    %31 = vector.broadcast %0 : f32 to vector<2x128xf32>
    %32 = arith.mulf %30, %31 : vector<2x128xf32>
    %33 = vector.broadcast %2 : f32 to vector<2x128xf32>
    %34 = arith.addf %32, %33 : vector<2x128xf32>
    %35 = vector.broadcast %1 : f32 to vector<2x128xf32>
    %36 = arith.mulf %30, %35 : vector<2x128xf32>
    %37 = vector.broadcast %3 : f32 to vector<2x128xf32>
    %38 = arith.addf %36, %37 : vector<2x128xf32>
    %39 = vector.broadcast %4 : f32 to vector<2x128xf32>
    %40 = arith.mulf %28, %39 : vector<2x128xf32>
    %41 = vector.broadcast %6 : f32 to vector<2x128xf32>
    %42 = arith.addf %40, %41 : vector<2x128xf32>
    %43 = vector.broadcast %5 : f32 to vector<2x128xf32>
    %44 = arith.mulf %28, %43 : vector<2x128xf32>
    %45 = vector.broadcast %7 : f32 to vector<2x128xf32>
    %46 = arith.addf %44, %45 : vector<2x128xf32>
    %47 = arith.addf %24, %34 : vector<2x128xf32>
    %48 = arith.addf %47, %42 : vector<2x128xf32>
    %49 = arith.addf %26, %38 : vector<2x128xf32>
    %50 = arith.addf %49, %46 : vector<2x128xf32>
    %51 = vector.broadcast %11 : f32 to vector<2x128xf32>
    %52 = arith.mulf %48, %51 : vector<2x128xf32>
    %53 = vector.broadcast %12 : f32 to vector<2x128xf32>
    %54 = arith.mulf %50, %53 : vector<2x128xf32>
    %55 = arith.addf %52, %54 : vector<2x128xf32>
    %56 = vector.broadcast %13 : f32 to vector<2x128xf32>
    %57 = arith.addf %55, %56 : vector<2x128xf32>
    %cst = arith.constant 5.000000e-01 : f32
    %58 = vector.broadcast %cst : f32 to vector<2x128xf32>
    %59 = arith.mulf %58, %57 : vector<2x128xf32>
    %60 = math.tanh %59 : vector<2x128xf32>
    %cst_16 = arith.constant 1.000000e+00 : f32
    %61 = vector.broadcast %cst_16 : f32 to vector<2x128xf32>
    %62 = arith.mulf %61, %60 : vector<2x128xf32>
    %63 = vector.broadcast %18 : f32 to vector<2x128xf32>
    %64 = arith.mulf %48, %63 : vector<2x128xf32>
    %65 = vector.broadcast %19 : f32 to vector<2x128xf32>
    %66 = arith.mulf %50, %65 : vector<2x128xf32>
    %67 = arith.addf %64, %66 : vector<2x128xf32>
    %68 = vector.broadcast %20 : f32 to vector<2x128xf32>
    %69 = arith.addf %67, %68 : vector<2x128xf32>
    %70 = vector.broadcast %21 : f32 to vector<2x128xf32>
    %71 = arith.mulf %28, %70 : vector<2x128xf32>
    %72 = vector.broadcast %22 : f32 to vector<2x128xf32>
    %73 = arith.addf %71, %72 : vector<2x128xf32>
    %74 = arith.addf %30, %69 : vector<2x128xf32>
    %75 = arith.addf %74, %73 : vector<2x128xf32>
    %76 = vector.broadcast %16 : f32 to vector<2x128xf32>
    %77 = arith.mulf %75, %76 : vector<2x128xf32>
    %78 = vector.broadcast %17 : f32 to vector<2x128xf32>
    %79 = arith.addf %77, %78 : vector<2x128xf32>
    %cst_17 = arith.constant 5.000000e-01 : f32
    %80 = vector.broadcast %cst_17 : f32 to vector<2x128xf32>
    %81 = arith.mulf %80, %79 : vector<2x128xf32>
    %82 = math.tanh %81 : vector<2x128xf32>
    %cst_18 = arith.constant 1.000000e+00 : f32
    %83 = vector.broadcast %cst_18 : f32 to vector<2x128xf32>
    %84 = arith.mulf %83, %82 : vector<2x128xf32>
    %85 = vector.broadcast %8 : f32 to vector<2x128xf32>
    %86 = arith.mulf %48, %85 : vector<2x128xf32>
    %87 = vector.broadcast %9 : f32 to vector<2x128xf32>
    %88 = arith.mulf %50, %87 : vector<2x128xf32>
    %89 = arith.addf %86, %88 : vector<2x128xf32>
    %90 = vector.broadcast %10 : f32 to vector<2x128xf32>
    %91 = arith.addf %89, %90 : vector<2x128xf32>
    %92 = vector.broadcast %14 : f32 to vector<2x128xf32>
    %93 = arith.mulf %75, %92 : vector<2x128xf32>
    %94 = vector.broadcast %15 : f32 to vector<2x128xf32>
    %95 = arith.addf %93, %94 : vector<2x128xf32>
    %96 = arith.addf %62, %84 : vector<2x128xf32>
    %97 = math.exp %96 : vector<2x128xf32>
    %98 = arith.mulf %28, %97 : vector<2x128xf32>
    %99 = arith.addf %98, %91 : vector<2x128xf32>
    %100 = arith.addf %99, %95 : vector<2x128xf32>
    %c0_19 = arith.constant 0 : index
    %c0_20 = arith.constant 0 : index
    %c0_21 = arith.constant 0 : index
    %c0_22 = arith.constant 0 : index
    %101 = vector.load %arg4[%c0_19, %c0_20, %c0_21, %c0_22] : memref<1x4x2x128xf32, #tpu.memory_space<vmem>>, vector<1x1x2x128xf32>
    %102 = vector.shape_cast %101 : vector<1x1x2x128xf32> to vector<2x128xf32>
    %103 = vector.shape_cast %48 : vector<2x128xf32> to vector<1x1x2x128xf32>
    tpu.vector_store %arg4[%c0_19, %c0_20, %c0_21, %c0_22], %103 {strides = array<i32>} : memref<1x4x2x128xf32, #tpu.memory_space<vmem>>, vector<1x1x2x128xf32>,
    %c0_23 = arith.constant 0 : index
    %c1_24 = arith.constant 1 : index
    %c0_25 = arith.constant 0 : index
    %c0_26 = arith.constant 0 : index
    %104 = vector.load %arg4[%c0_23, %c1_24, %c0_25, %c0_26] : memref<1x4x2x128xf32, #tpu.memory_space<vmem>>, vector<1x1x2x128xf32>
    %105 = vector.shape_cast %104 : vector<1x1x2x128xf32> to vector<2x128xf32>
    %106 = vector.shape_cast %50 : vector<2x128xf32> to vector<1x1x2x128xf32>
    tpu.vector_store %arg4[%c0_23, %c1_24, %c0_25, %c0_26], %106 {strides = array<i32>} : memref<1x4x2x128xf32, #tpu.memory_space<vmem>>, vector<1x1x2x128xf32>,
    %c0_27 = arith.constant 0 : index
    %c2_28 = arith.constant 2 : index
    %c0_29 = arith.constant 0 : index
    %c0_30 = arith.constant 0 : index
    %107 = vector.load %arg4[%c0_27, %c2_28, %c0_29, %c0_30] : memref<1x4x2x128xf32, #tpu.memory_space<vmem>>, vector<1x1x2x128xf32>
    %108 = vector.shape_cast %107 : vector<1x1x2x128xf32> to vector<2x128xf32>
    %109 = vector.shape_cast %100 : vector<2x128xf32> to vector<1x1x2x128xf32>
    tpu.vector_store %arg4[%c0_27, %c2_28, %c0_29, %c0_30], %109 {strides = array<i32>} : memref<1x4x2x128xf32, #tpu.memory_space<vmem>>, vector<1x1x2x128xf32>,
    %c0_31 = arith.constant 0 : index
    %c3_32 = arith.constant 3 : index
    %c0_33 = arith.constant 0 : index
    %c0_34 = arith.constant 0 : index
    %110 = vector.load %arg4[%c0_31, %c3_32, %c0_33, %c0_34] : memref<1x4x2x128xf32, #tpu.memory_space<vmem>>, vector<1x1x2x128xf32>
    %111 = vector.shape_cast %110 : vector<1x1x2x128xf32> to vector<2x128xf32>
    %112 = vector.shape_cast %75 : vector<2x128xf32> to vector<1x1x2x128xf32>
    tpu.vector_store %arg4[%c0_31, %c3_32, %c0_33, %c0_34], %112 {strides = array<i32>} : memref<1x4x2x128xf32, #tpu.memory_space<vmem>>, vector<1x1x2x128xf32>,
    return
  }
  func.func @transform_0(%arg0: i32, %arg1: i32) -> i32 {
    %c0_i32 = arith.constant 0 : i32
    %c0_i32_0 = arith.constant 0 : i32
    return %c0_i32 : i32
  }
  func.func @transform_1(%arg0: i32, %arg1: i32) -> (i32, i32, i32, i32) {
    %c0_i32 = arith.constant 0 : i32
    %c0_i32_0 = arith.constant 0 : i32
    %c0_i32_1 = arith.constant 0 : i32
    return %arg0, %c0_i32, %arg1, %c0_i32_0 : i32, i32, i32, i32
  }
  func.func @transform_2(%arg0: i32, %arg1: i32) -> (i32, i32, i32, i32) {
    %c0_i32 = arith.constant 0 : i32
    %c0_i32_0 = arith.constant 0 : i32
    %c0_i32_1 = arith.constant 0 : i32
    return %arg0, %c0_i32, %arg1, %c0_i32_0 : i32, i32, i32, i32
  }
}

</mosaic_0001>

<llo_original>
// kernel: three_c_inv_block_fwd.1
$region0: #{three_c_inv_block_fwd.1}
  #allocation0 [shape = 'u32[]', space=smem, size = 0x4, offset = 0x4, fixed_abs, tag = 'smem constant byte address 0x4 - core index']
  #allocation1 [shape = 'u32[144,128]{1,0:T(1,128)}', space=vmem, size = 0x12000, scoped, tag = 'internal scratch']
  %s0 = inlined_call_operand.vmem [shape: f32[23], index: 0, kind: input, shape index: {}]
  %s1 = inlined_call_operand.vmem [shape: f32[2,4,2,128], index: 1, kind: input, shape index: {}]
  %s2 = inlined_call_operand.vmem [shape: f32[2,4,2,128], index: 2, kind: output, shape index: {}]
  %s3 = sld [smem:[#allocation0]]
  $region45: #{three_c_inv_block_fwd.1} parent=0
    _
  %s5 = ssub.s32 1, %s3
  %s6 = scalar_select 0, %s5, %s3
  $region1: #{three_c_inv_block_fwd.1} parent=0
    #allocation2 [shape = 'u8[512]{0}', space=smem, size = 0x200, scoped, tag = 'input window, operand 0, single buffered']
    #allocation3 [shape = 's32[2]{0}', space=sflag, size = 0x8, scoped, tag = 'scoped memory for three_c_inv_block_fwd.1']
    %7 = vsyncpa [#allocation3], 0
    loop: start=0, step=1, limit=4
    $region2: #{three_c_inv_block_fwd.1} parent=1 // loop_pre_header
      _
    $region3: #{three_c_inv_block_fwd.1} parent=1 // loop_header
      %s9 = sphi 0, %s13
      %p10 = scmp.ge.s32.totalorder %s9, 4
      %s16 = sphi 0, %s28
      %s17 = sphi 0, %s24
      %s18 = sphi 0, %s16
      %s19 = sphi 0, %s17
      %s20 = sphi 0, %s18
      %s21 = sphi 0, %s19
      %s29 = sphi 0, %s29
      %s31 = sphi 0, %s29
      %s32 = sphi 0, %s31
      %s46 = sphi 0, %s32
      %s54 = sphi 0, %s56
      %s57 = sphi 0, %s54
      %s58 = sphi 0, %s57
      %s74 = sphi 0, %s58
      %s82 = sphi 0, %s84
      %s85 = sphi 0, %s82
      %s86 = sphi 0, %s85
      %s102 = sphi 0, %s86
    $region4: #{three_c_inv_block_fwd.1} parent=1 // loop_header_branch
      %12 = sbr.rel (%p10) target = $region8
    $region5: #{three_c_inv_block_fwd.1} parent=1 // loop_body
      %s14 = ssub.s32 %s9, 1
      %s15 = ssub.s32 %s9, 2
      %s22 = sadd.s32 1, %s17
      %p23 = scmp.ge.s32.totalorder %s22, 1
      %s24 = scalar_select %p23, 0, %s22
      %s25 = sadd.s32 1, %s16
      %s26 = scalar_select %p23, %s25, %s16
      %p27 = scmp.ge.s32.totalorder %s26, 2
      %s28 = scalar_select %p27, 0, %s26
      %s30 = sadd.s32 %s29, 1
      %p33 = scmp.eq.s32.totalorder %s9, 1
      %p34 = scmp.ne.s32.totalorder %s29, %s31
      %p35 = scmp.eq.s32.totalorder %s9, 0
      %p36 = por %p34, %p35
      %p37 = scmp.ne.s32.totalorder %s29, %s31
      %p38 = scmp.eq.s32.totalorder %s14, 1
      %p39 = por %p37, %p38
      %p40 = scmp.ne.s32.totalorder %s31, %s32
      %p41 = scmp.eq.s32.totalorder %s14, 0
      %p42 = por %p40, %p41
      %p43 = scmp.ne.s32.totalorder %s31, %s32
      %p44 = scmp.eq.s32.totalorder %s15, 1
      %p45 = por %p43, %p44
      %p47 = scmp.ne.s32.totalorder %s32, %s46
      %p48 = scmp.eq.s32.totalorder %s15, 0
      %p49 = por %p47, %p48
      %s50 = ssub.s32 %s16, %s28
      %s51 = ssub.s32 %s17, %s24
      %s52 = sor.u32 %s50, %s51
      %p53 = scmp.eq.s32.totalorder %s52, 0
      %s55 = sadd.s32 %s54, 1
      %s56 = scalar_select %p53, %s54, %s55
      %p59 = pneg %p53
      %p60 = scmp.eq.s32.totalorder %s9, 1
      %p61 = por %p59, %p60
      %p62 = scmp.ne.s32.totalorder %s54, %s57
      %p63 = scmp.eq.s32.totalorder %s9, 0
      %p64 = por %p62, %p63
      %p65 = scmp.ne.s32.totalorder %s54, %s57
      %p66 = scmp.eq.s32.totalorder %s14, 1
      %p67 = por %p65, %p66
      %p68 = scmp.ne.s32.totalorder %s57, %s58
      %p69 = scmp.eq.s32.totalorder %s14, 0
      %p70 = por %p68, %p69
      %p71 = scmp.ne.s32.totalorder %s57, %s58
      %p72 = scmp.eq.s32.totalorder %s15, 1
      %p73 = por %p71, %p72
      %p75 = scmp.ne.s32.totalorder %s58, %s74
      %p76 = scmp.eq.s32.totalorder %s15, 0
      %p77 = por %p75, %p76
      %s78 = ssub.s32 %s16, %s28
      %s79 = ssub.s32 %s17, %s24
      %s80 = sor.u32 %s78, %s79
      %p81 = scmp.eq.s32.totalorder %s80, 0
      %s83 = sadd.s32 %s82, 1
      %s84 = scalar_select %p81, %s82, %s83
      %p87 = pneg %p81
      %p88 = scmp.eq.s32.totalorder %s9, 1
      %p89 = por %p87, %p88
      %p90 = scmp.ne.s32.totalorder %s82, %s85
      %p91 = scmp.eq.s32.totalorder %s9, 0
      %p92 = por %p90, %p91
      %p93 = scmp.ne.s32.totalorder %s82, %s85
      %p94 = scmp.eq.s32.totalorder %s14, 1
      %p95 = por %p93, %p94
      %p96 = scmp.ne.s32.totalorder %s85, %s86
      %p97 = scmp.eq.s32.totalorder %s14, 0
      %p98 = por %p96, %p97
      %p99 = scmp.ne.s32.totalorder %s85, %s86
      %p100 = scmp.eq.s32.totalorder %s15, 1
      %p101 = por %p99, %p100
      %p103 = scmp.ne.s32.totalorder %s86, %s102
      %p104 = scmp.eq.s32.totalorder %s15, 0
      %p105 = por %p103, %p104
      %p106 = scmp.le.s32.totalorder 1, %s9
      %p107 = scmp.lt.s32.totalorder %s9, 3
      %p108 = pnand %p106, %p107
      %p109 = pneg %p108
      // Predicated region
      $region9: #{three_c_inv_block_fwd.1} parent=5 // pred_check
        _
      $region10: #{three_c_inv_block_fwd.1} parent=5 // pred_check_branch
        %111 = sbr.rel (%p108) target = $region12
      $region11: #{three_c_inv_block_fwd.1} parent=5 // pred_region
        %s112 = ssub.s32 %s9, 1
        // Predicated region
        $region13: #{three_c_inv_block_fwd.1} parent=11 // pred_check
          %p113 = pneg %p42
        $region14: #{three_c_inv_block_fwd.1} parent=11 // pred_check_branch
          %115 = sbr.rel (%p113) target = $region16
        $region15: #{three_c_inv_block_fwd.1} parent=11 // pred_region
          %s117 = ssub.s32 16, 16
          %118 = vsyncadd [#allocation3], %s117
          %s120 = sshll.u32 %s0, 4
          %s121 = int_to_ptr.vmem [resolvable:$true] %s120
          %123 = dma.vmem_to_smem %s121, 16, [#allocation2], [#allocation3]
        $region16: #{three_c_inv_block_fwd.1} parent=11 // pred_fallthru
          _
      $region12: #{three_c_inv_block_fwd.1} parent=5 // pred_fallthru
        _
      %p124 = scmp.lt.s32.totalorder %s9, 2
      // Predicated region
      $region17: #{three_c_inv_block_fwd.1} parent=5 // pred_check
        %p125 = pneg %p124
      $region18: #{three_c_inv_block_fwd.1} parent=5 // pred_check_branch
        %127 = sbr.rel (%p125) target = $region20
      $region19: #{three_c_inv_block_fwd.1} parent=5 // pred_region
        // Predicated region
        $region21: #{three_c_inv_block_fwd.1} parent=19 // pred_check
          %p128 = pneg %p64
        $region22: #{three_c_inv_block_fwd.1} parent=19 // pred_check_branch
          %130 = sbr.rel (%p128) target = $region24
        $region23: #{three_c_inv_block_fwd.1} parent=19 // pred_region
          %p131 = scmp.lt.s32.totalorder %s16, 1
          %s132 = scalar_select %p131, %s16, 1
          %p133 = scmp.lt.s32.totalorder %s17, 0
          %s134 = scalar_select %p133, %s17, 0
          %s135 = smul.addr %s132, 4
          %s136 = sadd.s32 %s134, %s135
          %s137 = smul.addr %s136, 2
          %s138 = scalar_lea.vmem %s1, %s137
        $region24: #{three_c_inv_block_fwd.1} parent=19 // pred_fallthru
          _
      $region20: #{three_c_inv_block_fwd.1} parent=5 // pred_fallthru
        _
      %p139 = scmp.le.s32.totalorder 1, %s9
      %p140 = scmp.lt.s32.totalorder %s9, 3
      %p141 = pnand %p139, %p140
      %p142 = pneg %p141
      // Predicated region
      $region25: #{three_c_inv_block_fwd.1} parent=5 // pred_check
        _
      $region26: #{three_c_inv_block_fwd.1} parent=5 // pred_check_branch
        %144 = sbr.rel (%p141) target = $region28
      $region27: #{three_c_inv_block_fwd.1} parent=5 // pred_region
        %s145 = ssub.s32 %s9, 1
        // Predicated region
        $region29: #{three_c_inv_block_fwd.1} parent=27 // pred_check
          %p146 = pneg %p42
        $region30: #{three_c_inv_block_fwd.1} parent=27 // pred_check_branch
          %148 = sbr.rel (%p146) target = $region32
        $region31: #{three_c_inv_block_fwd.1} parent=27 // pred_region
          %149 = dma.done [#allocation3], 16
        $region32: #{three_c_inv_block_fwd.1} parent=27 // pred_fallthru
          _
        %150 = sfence
        %p151 = pneg %p42
        %p152 = pneg %p39
        %p153 = scmp.lt.s32.totalorder %s18, 1
        %s154 = scalar_select %p153, %s18, 1
        %p155 = scmp.lt.s32.totalorder %s19, 0
        %s156 = scalar_select %p155, %s19, 0
        %s157 = smul.addr %s154, 4
        %s158 = sadd.s32 %s156, %s157
        %s159 = smul.addr %s158, 2
        %s160 = scalar_lea.vmem %s1, %s159
        %p161 = pneg %p70
        %p162 = pneg %p67
        %p163 = pneg %p98
        %p164 = pneg %p95
        %p165 = scmp.lt.s32.totalorder %s18, 1
        %s166 = scalar_select %p165, %s18, 1
        %p167 = scmp.lt.s32.totalorder %s19, 0
        %s168 = scalar_select %p167, %s19, 0
        %s169 = smul.addr %s166, 4
        %s170 = sadd.s32 %s168, %s169
        %s171 = smul.addr %s170, 2
        %s172 = scalar_lea.vmem %s2, %s171
        %p173 = scmp.lt.s32.totalorder %s18, 1
        %s174 = scalar_select %p173, %s18, 1
        %p175 = scmp.lt.s32.totalorder %s19, 0
        %s176 = scalar_select %p175, %s19, 0
        %s177 = smul.addr %s174, 4
        %s178 = sadd.s32 %s176, %s177
        %s179 = smul.addr %s178, 2
        %s180 = scalar_lea.vmem %s1, %s179
        %p181 = scmp.lt.s32.totalorder %s18, 1
        %s182 = scalar_select %p181, %s18, 1
        %p183 = scmp.lt.s32.totalorder %s19, 0
        %s184 = scalar_select %p183, %s19, 0
        %s185 = smul.addr %s182, 4
        %s186 = sadd.s32 %s184, %s185
        %s187 = smul.addr %s186, 2
        %s188 = scalar_lea.vmem %s2, %s187
        %s189 = sld [smem:[#allocation2]]
        %s190 = sld [smem:[#allocation2 + $0x1]]
        %s191 = sld [smem:[#allocation2 + $0x2]]
        %s192 = sld [smem:[#allocation2 + $0x3]]
        %s193 = sld [smem:[#allocation2 + $0x4]]
        %s194 = sld [smem:[#allocation2 + $0x5]]
        %s195 = sld [smem:[#allocation2 + $0x6]]
        %s196 = sld [smem:[#allocation2 + $0x7]]
        %s197 = sld [smem:[#allocation2 + $0x8]]
        %s198 = sld [smem:[#allocation2 + $0x9]]
        %s199 = sld [smem:[#allocation2 + $0xa]]
        %s200 = sld [smem:[#allocation2 + $0xb]]
        %s201 = sld [smem:[#allocation2 + $0xc]]
        %s202 = sld [smem:[#allocation2 + $0xd]]
        %s203 = sld [smem:[#allocation2 + $0xe]]
        %s204 = sld [smem:[#allocation2 + $0xf]]
        %s205 = sld [smem:[#allocation2 + $0x10]]
        %s206 = sld [smem:[#allocation2 + $0x11]]
        %s207 = sld [smem:[#allocation2 + $0x12]]
        %s208 = sld [smem:[#allocation2 + $0x13]]
        %s209 = sld [smem:[#allocation2 + $0x14]]
        %s210 = sld [smem:[#allocation2 + $0x15]]
        %s211 = sld [smem:[#allocation2 + $0x16]]
        %v212 = vld [vmem:[%s180] sm:$0x3]
        %s213 = scalar_lea.vmem %s180, 2
        %v214 = vld [vmem:[%s213] sm:$0x3]
        %s215 = scalar_lea.vmem %s180, 4
        %v216 = vld [vmem:[%s215] sm:$0x3]
        %s217 = scalar_lea.vmem %s180, 6
        %v218 = vld [vmem:[%s217] sm:$0x3]
        %v219 = vstv %s189
        %v220 = vmul.f32 %v218, %v219
        %v221 = vstv %s191
        %v222 = vadd.f32 %v220, %v221
        %v223 = vstv %s190
        %v224 = vmul.f32 %v218, %v223
        %v225 = vstv %s192
        %v226 = vadd.f32 %v224, %v225
        %v227 = vstv %s193
        %v228 = vmul.f32 %v216, %v227
        %v229 = vstv %s195
        %v230 = vadd.f32 %v228, %v229
        %v231 = vstv %s194
        %v232 = vmul.f32 %v216, %v231
        %v233 = vstv %s196
        %v234 = vadd.f32 %v232, %v233
        %v235 = vadd.f32 %v212, %v222
        %v236 = vadd.f32 %v235, %v230
        %v237 = vadd.f32 %v214, %v226
        %v238 = vadd.f32 %v237, %v234
        %v239 = vstv %s200
        %v240 = vmul.f32 %v236, %v239
        %v241 = vstv %s201
        %v242 = vmul.f32 %v238, %v241
        %v243 = vadd.f32 %v240, %v242
        %v244 = vstv %s202
        %v245 = vadd.f32 %v243, %v244
        %v246 = vmul.f32 %v245, 0.5
        %v247 = vtanh.pop %v246
        %v248 = vstv %s207
        %v249 = vmul.f32 %v236, %v248
        %v250 = vstv %s208
        %v251 = vmul.f32 %v238, %v250
        %v252 = vadd.f32 %v249, %v251
        %v253 = vstv %s209
        %v254 = vadd.f32 %v252, %v253
        %v255 = vstv %s210
        %v256 = vmul.f32 %v216, %v255
        %v257 = vstv %s211
        %v258 = vadd.f32 %v256, %v257
        %v259 = vadd.f32 %v218, %v254
        %v260 = vadd.f32 %v259, %v258
        %v261 = vstv %s205
        %v262 = vmul.f32 %v260, %v261
        %v263 = vstv %s206
        %v264 = vadd.f32 %v262, %v263
        %v265 = vmul.f32 %v264, 0.5
        %v266 = vtanh.pop %v265
        %v267 = vstv %s197
        %v268 = vmul.f32 %v236, %v267
        %v269 = vstv %s198
        %v270 = vmul.f32 %v238, %v269
        %v271 = vadd.f32 %v268, %v270
        %v272 = vstv %s199
        %v273 = vadd.f32 %v271, %v272
        %v274 = vstv %s203
        %v275 = vmul.f32 %v260, %v274
        %v276 = vstv %s204
        %v277 = vadd.f32 %v275, %v276
        %v278 = vadd.f32 %v247, %v266
        %v279 = vmul.f32 %v278, 1.442695
        %v280 = vpow.pop %v279
        %v281 = vmul.f32 %v216, %v280
        %v282 = vadd.f32 %v281, %v273
        %v283 = vadd.f32 %v282, %v277
        %284 = vst [vmem:[%s188] sm:$0x3] %v236
        %s285 = scalar_lea.vmem %s188, 2
        %286 = vst [vmem:[%s285] sm:$0x3] %v238
        %s287 = scalar_lea.vmem %s188, 4
        %288 = vst [vmem:[%s287] sm:$0x3] %v283
        %s289 = scalar_lea.vmem %s188, 6
        %290 = vst [vmem:[%s289] sm:$0x3] %v260
        %p291 = scmp.lt.s32.totalorder %s18, 1
        %s292 = scalar_select %p291, %s18, 1
        %p293 = scmp.lt.s32.totalorder %s19, 0
        %s294 = scalar_select %p293, %s19, 0
        %s295 = smul.addr %s292, 4
        %s296 = sadd.s32 %s294, %s295
        %s297 = smul.addr %s296, 2
        %s298 = scalar_lea.vmem %s2, %s297
        // Predicated region
        $region33: #{three_c_inv_block_fwd.1} parent=27 // pred_check
          %p299 = pneg %p95
        $region34: #{three_c_inv_block_fwd.1} parent=27 // pred_check_branch
          %301 = sbr.rel (%p299) target = $region36
        $region35: #{three_c_inv_block_fwd.1} parent=27 // pred_region
          _
        $region36: #{three_c_inv_block_fwd.1} parent=27 // pred_fallthru
          _
      $region28: #{three_c_inv_block_fwd.1} parent=5 // pred_fallthru
        _
      %p302 = scmp.le.s32.totalorder 2, %s9
      // Predicated region
      $region37: #{three_c_inv_block_fwd.1} parent=5 // pred_check
        %p303 = pneg %p302
      $region38: #{three_c_inv_block_fwd.1} parent=5 // pred_check_branch
        %305 = sbr.rel (%p303) target = $region40
      $region39: #{three_c_inv_block_fwd.1} parent=5 // pred_region
        %s306 = ssub.s32 %s9, 2
        // Predicated region
        $region41: #{three_c_inv_block_fwd.1} parent=39 // pred_check
          %p307 = pneg %p101
        $region42: #{three_c_inv_block_fwd.1} parent=39 // pred_check_branch
          %309 = sbr.rel (%p307) target = $region44
        $region43: #{three_c_inv_block_fwd.1} parent=39 // pred_region
          %p310 = scmp.lt.s32.totalorder %s20, 1
          %s311 = scalar_select %p310, %s20, 1
          %p312 = scmp.lt.s32.totalorder %s21, 0
          %s313 = scalar_select %p312, %s21, 0
          %s314 = smul.addr %s311, 4
          %s315 = sadd.s32 %s313, %s314
          %s316 = smul.addr %s315, 2
          %s317 = scalar_lea.vmem %s2, %s316
        $region44: #{three_c_inv_block_fwd.1} parent=39 // pred_fallthru
          _
      $region40: #{three_c_inv_block_fwd.1} parent=5 // pred_fallthru
        _
    $region6: #{three_c_inv_block_fwd.1} parent=1 // loop_footer
      %s13 = sadd.s32 1, %s9
    $region7: #{three_c_inv_block_fwd.1} parent=1 // loop_footer_branch
      %8 = sbr.rel target = $region3
    $region8: #{three_c_inv_block_fwd.1} parent=1 // loop_exit
      _
    %318 = vsyncpa [#allocation3], 1
    %s319 = scalar_lea.sflag [#allocation3], 1
    %320 = vsyncpa %s319, 1

</llo_original>
